<compile_context>
chip_gen: v6e
topology: v6e:2x2x1
jax: 0.10.0
libtpu: 0.0.40
codegen_flags: <defaults>
</compile_context>

<pallas_src>
import functools

import jax
import jax.numpy as jnp
import numpy as np
from jax import lax
from jax.experimental import pallas as pl
from jax.experimental.pallas import tpu as pltpu


def _round_up(v, m):
    return (v + m - 1) // m * m


@functools.lru_cache(maxsize=None)
def _hw_config():
    """Generation-aware budgets: (vmem_limit_bytes, streamed tile target, fused-path cap)."""
    phys = 64 << 20
    try:
        phys = int(pltpu.get_tpu_info().vmem_capacity_bytes)
    except Exception:
        pass  # conservative fallback (v7x-sized VMEM)
    if phys >= (96 << 20):          # v5e / v6e: 128 MiB physical VMEM
        vmem_limit, tile_target = 48 << 20, 4 << 20
    else:                           # v7x: 64 MiB physical VMEM per TensorCore
        vmem_limit, tile_target = 28 << 20, 2 << 20
    fused_max = vmem_limit // 8     # head-room for in/out buffers + f32 temps in the fused kernel
    return vmem_limit, tile_target, fused_max


def _pick_tiles(R, Lc, itemsize, target_bytes):
    """Pick (rb, tl) block dims for a (R, Lc) slab.

    rb divides R and is a multiple of 8 (or == R); tl divides Lc and is a multiple
    of 128 (or == Lc). Prefers >= 2 row blocks (v7x megacore on the 'parallel' axis)
    and >= 4 total grid steps (pipelining) while keeping rb*tl*itemsize <= target.
    """
    row_divs = [d for d in range(8, R + 1, 8) if R % d == 0] or [R]
    col_divs = [d for d in range(128, Lc + 1, 128) if Lc % d == 0] or [Lc]

    split_divs = [d for d in row_divs if R // d >= 2]
    rb_cands = split_divs or row_divs
    rb = rb_cands[0]
    for d in rb_cands:
        if d * col_divs[0] * itemsize <= target_bytes:
            rb = d

    tl = col_divs[0]
    for d in col_divs:
        if rb * d * itemsize <= target_bytes:
            tl = d

    # Keep >= 4 grid steps so the BlockSpec pipeline can double-buffer the DMAs.
    while (R // rb) * (Lc // tl) < 4:
        smaller_tl = [d for d in col_divs if d < tl]
        smaller_rb = [d for d in rb_cands if d < rb]
        if smaller_tl:
            tl = max(smaller_tl)
        elif smaller_rb:
            rb = max(smaller_rb)
        else:
            break
    return rb, tl


# ---------------- fused single-pass kernel (x resident in VMEM) ----------------
def _fused_kernel(x_ref, g_ref, b_ref, o_ref, *, inv_count, eps):
    x = x_ref[...].astype(jnp.float32)                                   # (N, C, L)
    s = jnp.sum(jnp.sum(x, axis=2, keepdims=True), axis=0, keepdims=True)
    mean = s * inv_count                                                 # (1, C, 1)
    d = x - mean
    var = jnp.sum(jnp.sum(d * d, axis=2, keepdims=True), axis=0, keepdims=True) * inv_count
    inv = lax.rsqrt(var + eps)
    scale = g_ref[...].astype(jnp.float32) * inv                         # (1, C, 1)
    bias = b_ref[...].astype(jnp.float32)
    o_ref[...] = jnp.maximum(d * scale + bias, 0.0).astype(o_ref.dtype)


# ---------------- pass 1: per-row partial sum and sum-of-squares ----------------
def _stats_kernel(x_ref, sum_ref, sq_ref):
    @pl.when(pl.program_id(1) == 0)
    def _():
        sum_ref[...] = jnp.zeros_like(sum_ref)
        sq_ref[...] = jnp.zeros_like(sq_ref)

    # DMA-bound regime: the per-tile cross-lane reduce (XLU) and 1-lane accumulate
    # sit well under the HBM roofline, so keep the body simple.
    x = x_ref[...].astype(jnp.float32)                                   # (rb, tl)
    sum_ref[...] += jnp.sum(x, axis=1, keepdims=True)                    # (rb, 1)
    sq_ref[...] += jnp.sum(x * x, axis=1, keepdims=True)


# ---------------- pass 2: fused scale/bias + ReLU (lane-dense streaming) --------
def _apply_kernel(x_ref, scale_ref, bias_ref, o_ref):
    x = x_ref[...].astype(jnp.float32)                                   # (rb, tl)
    y = x * scale_ref[...] + bias_ref[...]                               # (rb, 1) broadcasts
    o_ref[...] = jnp.maximum(y, 0.0).astype(o_ref.dtype)


def bn_relu_act(x_nchw, gamma, beta, *, eps=1e-5, force_two_pass=False):
    """BatchNorm2d (training-mode batch stats, biased var) + ReLU. x: (N, C, H, W)."""
    N, C, H, W = x_nchw.shape
    L = H * W
    R = N * C
    itemsize = x_nchw.dtype.itemsize
    vmem_limit, tile_target, fused_max = _hw_config()
    count = float(N * L)

    # ---- fused fast path: whole activation resident in VMEM (1 read + 1 write) ----
    fused_bytes = N * _round_up(C, 8) * _round_up(L, 128) * 4            # f32 working copy
    if (not force_two_pass) and fused_bytes <= fused_max:
        x3d = x_nchw.reshape(N, C, L)
        kern = functools.partial(_fused_kernel, inv_count=1.0 / count, eps=float(eps))
        y3d = pl.pallas_call(
            kern,
            out_shape=jax.ShapeDtypeStruct((N, C, L), x_nchw.dtype),
            grid=(1,),
            in_specs=[
                pl.BlockSpec((N, C, L), lambda i: (0, 0, 0)),
                pl.BlockSpec((1, C, 1), lambda i: (0, 0, 0)),
                pl.BlockSpec((1, C, 1), lambda i: (0, 0, 0)),
            ],
            out_specs=pl.BlockSpec((N, C, L), lambda i: (0, 0, 0)),
            compiler_params=pltpu.CompilerParams(
                dimension_semantics=("arbitrary",),
                vmem_limit_bytes=vmem_limit),
        )(x3d, gamma.reshape(1, C, 1), beta.reshape(1, C, 1))
        return y3d.reshape(N, C, H, W)

    # ---- streaming two-pass path on the flattened (N*C, H*W) slab ----
    x2d = x_nchw.reshape(R, L)                       # free: NCHW is contiguous as (N*C, H*W)
    if L % 128 == 0 or 8 * L * itemsize <= tile_target:
        Lc, x2d_in, padded = L, x2d, False           # lane-aligned, or full-extent column fits
    else:
        Lc = _round_up(L, 128)                       # large lane-misaligned H*W: pad once
        x2d_in = jnp.pad(x2d, ((0, 0), (0, Lc - L)))
        padded = True
    rb, tl = _pick_tiles(R, Lc, itemsize, tile_target)
    gr, gl = R // rb, Lc // tl

    # pass 1: per-row partial (sum, sumsq); reduction (column) axis last, row axis parallel.
    sums, sqs = pl.pallas_call(
        _stats_kernel,
        out_shape=(jax.ShapeDtypeStruct((R, 1), jnp.float32),
                   jax.ShapeDtypeStruct((R, 1), jnp.float32)),
        grid=(gr, gl),
        in_specs=[pl.BlockSpec((rb, tl), lambda i, j: (i, j))],
        out_specs=(pl.BlockSpec((rb, 1), lambda i, j: (i, 0)),
                   pl.BlockSpec((rb, 1), lambda i, j: (i, 0))),
        compiler_params=pltpu.CompilerParams(
            dimension_semantics=("parallel", "arbitrary"),
            vmem_limit_bytes=vmem_limit),
    )(x2d_in)

    # tiny XLA epilogue (fused by the surrounding jit): per-channel scale/bias -> per-row.
    sum_c = sums.reshape(N, C).sum(axis=0)
    sq_c = sqs.reshape(N, C).sum(axis=0)
    mean = sum_c / count
    var = jnp.maximum(sq_c / count - mean * mean, 0.0)   # clamp E[x^2]-mean^2 cancellation
    inv = lax.rsqrt(var + eps)
    scale_c = gamma.astype(jnp.float32) * inv
    bias_c = beta.astype(jnp.float32) - mean * scale_c
    scale_r = jnp.broadcast_to(scale_c[None, :], (N, C)).reshape(R, 1)
    bias_r = jnp.broadcast_to(bias_c[None, :], (N, C)).reshape(R, 1)

    # pass 2: y = max(x * scale + bias, 0), lane-dense streaming; both axes parallel.
    y2d = pl.pallas_call(
        _apply_kernel,
        out_shape=jax.ShapeDtypeStruct((R, Lc), x_nchw.dtype),
        grid=(gr, gl),
        in_specs=[
            pl.BlockSpec((rb, tl), lambda i, j: (i, j)),
            pl.BlockSpec((rb, 1), lambda i, j: (i, 0)),
            pl.BlockSpec((rb, 1), lambda i, j: (i, 0)),
        ],
        out_specs=pl.BlockSpec((rb, tl), lambda i, j: (i, j)),
        compiler_params=pltpu.CompilerParams(
            dimension_semantics=("parallel", "parallel"),
            vmem_limit_bytes=vmem_limit),
    )(x2d_in, scale_r, bias_r)

    if padded:
        y2d = y2d[:, :L]
    return y2d.reshape(N, C, H, W)


def _reference(x, gamma, beta, eps=1e-5):
    mean = jnp.mean(x, axis=(0, 2, 3), keepdims=True)
    var = jnp.mean((x - mean) ** 2, axis=(0, 2, 3), keepdims=True)
    y = (x - mean) * lax.rsqrt(var + eps)
    y = y * gamma.reshape(1, -1, 1, 1) + beta.reshape(1, -1, 1, 1)
    return jnp.maximum(y, 0.0)


if __name__ == "__main__":
    key = jax.random.PRNGKey(0)
    kx, kg, kb = jax.random.split(key, 3)

    fused_fn = jax.jit(bn_relu_act)
    streamed_fn = jax.jit(functools.partial(bn_relu_act, force_two_pass=True))

    # 1) Small activation (matches BatchNorm2d(num_features=4)) -> fused VMEM-resident path.
    N, C, H, W = 2, 4, 16, 16
    x = jax.random.normal(kx, (N, C, H, W), dtype=jnp.float32)
    gamma = 1.0 + 0.1 * jax.random.normal(kg, (C,), dtype=jnp.float32)
    beta = 0.1 * jax.random.normal(kb, (C,), dtype=jnp.float32)
    out = jax.block_until_ready(fused_fn(x, gamma, beta))
    np.testing.assert_allclose(np.asarray(out), np.asarray(_reference(x, gamma, beta)),
                               rtol=2e-5, atol=2e-5)

    # 2) Streaming two-pass path (lane-aligned H*W, multi-step grid with row split).
    N2, C2, H2, W2 = 2, 16, 32, 32
    x2 = jax.random.normal(kx, (N2, C2, H2, W2), dtype=jnp.float32)
    g2 = 1.0 + 0.1 * jax.random.normal(kg, (C2,), dtype=jnp.float32)
    b2 = 0.1 * jax.random.normal(kb, (C2,), dtype=jnp.float32)
    out2 = jax.block_until_ready(streamed_fn(x2, g2, b2))
    np.testing.assert_allclose(np.asarray(out2), np.asarray(_reference(x2, g2, b2)),
                               rtol=2e-5, atol=2e-5)

    # 3) Streaming path with H*W not a multiple of 128 (full-extent column block).
    N3, C3, H3, W3 = 2, 8, 10, 10
    x3 = jax.random.normal(kb, (N3, C3, H3, W3), dtype=jnp.float32)
    g3 = jnp.ones((C3,), jnp.float32)
    b3 = jnp.zeros((C3,), jnp.float32)
    out3 = jax.block_until_ready(streamed_fn(x3, g3, b3))
    np.testing.assert_allclose(np.asarray(out3), np.asarray(_reference(x3, g3, b3)),
                               rtol=2e-5, atol=2e-5)

    print("KERNEL_OK")
</pallas_src>

<mosaic_0001>
module attributes {stable_mosaic.version = 11 : i64} {
  func.func @_fused_kernel(%arg0: i32, %arg1: memref<2x4x256xf32, #tpu.memory_space<vmem>>, %arg2: memref<1x4x1xf32, #tpu.memory_space<vmem>>, %arg3: memref<1x4x1xf32, #tpu.memory_space<vmem>>, %arg4: memref<2x4x256xf32, #tpu.memory_space<vmem>>) attributes {dimension_semantics = [#tpu.dimension_semantics<arbitrary>], iteration_bounds = array<i64: 1>, scalar_prefetch = 0 : i64, scratch_operands = 0 : i64, tpu.core_type = #tpu.core_type<tc>, window_params = [{pipeline_mode = #tpu.pipeline_mode<synchronous>, transform_indices = @transform_0, window_bounds = array<i64: 2, 4, 256>}, {pipeline_mode = #tpu.pipeline_mode<synchronous>, transform_indices = @transform_1, window_bounds = array<i64: 1, 4, 1>}, {pipeline_mode = #tpu.pipeline_mode<synchronous>, transform_indices = @transform_2, window_bounds = array<i64: 1, 4, 1>}, {pipeline_mode = #tpu.pipeline_mode<synchronous>, transform_indices = @transform_3, window_bounds = array<i64: 2, 4, 256>}]} {
    %c0 = arith.constant 0 : index
    %c0_0 = arith.constant 0 : index
    %c0_1 = arith.constant 0 : index
    %0 = vector.load %arg1[%c0, %c0_0, %c0_1] : memref<2x4x256xf32, #tpu.memory_space<vmem>>, vector<2x4x256xf32>
    %cst = arith.constant dense<0.000000e+00> : vector<2x4xf32>
    %1 = vector.multi_reduction <add>, %0, %cst [2] : vector<2x4x256xf32> to vector<2x4xf32>
    %2 = vector.shape_cast %1 : vector<2x4xf32> to vector<2x4x1xf32>
    %cst_2 = arith.constant dense<0.000000e+00> : vector<4x1xf32>
    %3 = vector.multi_reduction <add>, %2, %cst_2 [0] : vector<2x4x1xf32> to vector<4x1xf32>
    %4 = vector.shape_cast %3 : vector<4x1xf32> to vector<1x4x1xf32>
    %cst_3 = arith.constant 0.001953125 : f32
    %5 = vector.broadcast %cst_3 : f32 to vector<1x4x1xf32>
    %6 = arith.mulf %4, %5 : vector<1x4x1xf32>
    %7 = vector.broadcast %6 : vector<1x4x1xf32> to vector<2x4x256xf32>
    %8 = arith.subf %0, %7 : vector<2x4x256xf32>
    %9 = arith.mulf %8, %8 : vector<2x4x256xf32>
    %cst_4 = arith.constant dense<0.000000e+00> : vector<2x4xf32>
    %10 = vector.multi_reduction <add>, %9, %cst_4 [2] : vector<2x4x256xf32> to vector<2x4xf32>
    %11 = vector.shape_cast %10 : vector<2x4xf32> to vector<2x4x1xf32>
    %cst_5 = arith.constant dense<0.000000e+00> : vector<4x1xf32>
    %12 = vector.multi_reduction <add>, %11, %cst_5 [0] : vector<2x4x1xf32> to vector<4x1xf32>
    %13 = vector.shape_cast %12 : vector<4x1xf32> to vector<1x4x1xf32>
    %cst_6 = arith.constant 0.001953125 : f32
    %14 = vector.broadcast %cst_6 : f32 to vector<1x4x1xf32>
    %15 = arith.mulf %13, %14 : vector<1x4x1xf32>
    %cst_7 = arith.constant 9.99999974E-6 : f32
    %16 = vector.broadcast %cst_7 : f32 to vector<1x4x1xf32>
    %17 = arith.addf %15, %16 : vector<1x4x1xf32>
    %18 = math.rsqrt %17 : vector<1x4x1xf32>
    %c0_8 = arith.constant 0 : index
    %c0_9 = arith.constant 0 : index
    %c0_10 = arith.constant 0 : index
    %19 = vector.load %arg2[%c0_8, %c0_9, %c0_10] : memref<1x4x1xf32, #tpu.memory_space<vmem>>, vector<1x4x1xf32>
    %20 = arith.mulf %19, %18 : vector<1x4x1xf32>
    %c0_11 = arith.constant 0 : index
    %c0_12 = arith.constant 0 : index
    %c0_13 = arith.constant 0 : index
    %21 = vector.load %arg3[%c0_11, %c0_12, %c0_13] : memref<1x4x1xf32, #tpu.memory_space<vmem>>, vector<1x4x1xf32>
    %22 = vector.broadcast %20 : vector<1x4x1xf32> to vector<2x4x256xf32>
    %23 = arith.mulf %8, %22 : vector<2x4x256xf32>
    %24 = vector.broadcast %21 : vector<1x4x1xf32> to vector<2x4x256xf32>
    %25 = arith.addf %23, %24 : vector<2x4x256xf32>
    %cst_14 = arith.constant 0.000000e+00 : f32
    %26 = vector.broadcast %cst_14 : f32 to vector<2x4x256xf32>
    %27 = arith.maximumf %25, %26 : vector<2x4x256xf32>
    %c0_15 = arith.constant 0 : index
    %c0_16 = arith.constant 0 : index
    %c0_17 = arith.constant 0 : index
    %28 = vector.load %arg4[%c0_15, %c0_16, %c0_17] : memref<2x4x256xf32, #tpu.memory_space<vmem>>, vector<2x4x256xf32>
    tpu.vector_store %arg4[%c0_15, %c0_16, %c0_17], %27 {strides = array<i32>} : memref<2x4x256xf32, #tpu.memory_space<vmem>>, vector<2x4x256xf32>,
    return
  }
  func.func @transform_0(%arg0: i32) -> (i32, i32, i32) {
    %c0_i32 = arith.constant 0 : i32
    %c0_i32_0 = arith.constant 0 : i32
    %c0_i32_1 = arith.constant 0 : i32
    %c0_i32_2 = arith.constant 0 : i32
    return %c0_i32, %c0_i32_0, %c0_i32_1 : i32, i32, i32
  }
  func.func @transform_1(%arg0: i32) -> (i32, i32, i32) {
    %c0_i32 = arith.constant 0 : i32
    %c0_i32_0 = arith.constant 0 : i32
    %c0_i32_1 = arith.constant 0 : i32
    %c0_i32_2 = arith.constant 0 : i32
    return %c0_i32, %c0_i32_0, %c0_i32_1 : i32, i32, i32
  }
  func.func @transform_2(%arg0: i32) -> (i32, i32, i32) {
    %c0_i32 = arith.constant 0 : i32
    %c0_i32_0 = arith.constant 0 : i32
    %c0_i32_1 = arith.constant 0 : i32
    %c0_i32_2 = arith.constant 0 : i32
    return %c0_i32, %c0_i32_0, %c0_i32_1 : i32, i32, i32
  }
  func.func @transform_3(%arg0: i32) -> (i32, i32, i32) {
    %c0_i32 = arith.constant 0 : i32
    %c0_i32_0 = arith.constant 0 : i32
    %c0_i32_1 = arith.constant 0 : i32
    %c0_i32_2 = arith.constant 0 : i32
    return %c0_i32, %c0_i32_0, %c0_i32_1 : i32, i32, i32
  }
}

</mosaic_0001>

<llo_original>
// kernel: bn_relu_act.1
$region0: #{bn_relu_act.1}
  #allocation0 [shape = 'u32[]', space=smem, size = 0x4, offset = 0x4, fixed_abs, tag = 'smem constant byte address 0x4 - core index']
  #allocation1 [shape = 'u32[144,128]{1,0:T(1,128)}', space=vmem, size = 0x12000, scoped, tag = 'internal scratch']
  %s0 = inlined_call_operand.vmem [shape: f32[2,4,256], index: 0, kind: input, shape index: {}]
  %s1 = inlined_call_operand.vmem [shape: f32[1,4,1], index: 1, kind: input, shape index: {}]
  %s2 = inlined_call_operand.vmem [shape: f32[1,4,1], index: 2, kind: input, shape index: {}]
  %s3 = inlined_call_operand.vmem [shape: f32[2,4,256], index: 3, kind: output, shape index: {}]
  %s4 = sld [smem:[#allocation0]]
  $region22: #{bn_relu_act.1} parent=0
    _
  %s6 = ssub.s32 1, %s4
  %s7 = scalar_select 0, %s6, %s4
  // Predicated region
  $region2: #{bn_relu_act.1} parent=0 // pred_check
    _
  $region3: #{bn_relu_act.1} parent=0 // pred_check_branch
    %9 = sbr.rel (0) target = $region5
  $region4: #{bn_relu_act.1} parent=0 // pred_region
    _
  $region5: #{bn_relu_act.1} parent=0 // pred_fallthru
    _
  // Predicated region
  $region6: #{bn_relu_act.1} parent=0 // pred_check
    _
  $region7: #{bn_relu_act.1} parent=0 // pred_check_branch
    %11 = sbr.rel (0) target = $region9
  $region8: #{bn_relu_act.1} parent=0 // pred_region
    _
  $region9: #{bn_relu_act.1} parent=0 // pred_fallthru
    _
  // Predicated region
  $region10: #{bn_relu_act.1} parent=0 // pred_check
    _
  $region11: #{bn_relu_act.1} parent=0 // pred_check_branch
    %13 = sbr.rel (0) target = $region13
  $region12: #{bn_relu_act.1} parent=0 // pred_region
    _
  $region13: #{bn_relu_act.1} parent=0 // pred_fallthru
    _
  %v14 = vld [vmem:[%s0] sm:$0xff]
  %v15 = vld [vmem:[%s0 + $0x8] sm:$0xff]
  %v18 = vcombine.high %v14, %v14
  %v19 = vcombine.high %v15, %v15
  %vm22 = vcmask 1043456
  %v23 = vsel %vm22, %v14, 0.0
  %v24 = vsel %vm22, %v18, 0.0
  %v25 = vadd.f32 %v23, %v24
  %26 = vadd.xlane.f32.xlu0 %v25
  %v27 = vpop.xlane.xlu0 %26
  %v28 = vsel %vm22, %v15, 0.0
  %v29 = vsel %vm22, %v19, 0.0
  %v30 = vadd.f32 %v28, %v29
  %31 = vadd.xlane.f32.xlu0 %v30
  %v32 = vpop.xlane.xlu0 %31
  %v33 = vsel %vm22, %v27, 0.0
  %v34 = vsel %vm22, %v32, 0.0
  %v35 = vadd.f32 %v33, %v34
  %v36 = vmul.f32 %v35, 0.001953125
  %v39 = vunpack.c.l.s4 839922192
  %v40 = vunpack.c.0.s8 %v39
  %v41 = vlaneseq
  %v42 = vshrl.u32 %v41, 7
  %v43 = vsub.s32 %v40, %v42
  %v44 = vrot.slane %v36, %v43
  %v46 = vsub.f32 %v14, %v44
  %v47 = vsub.f32 %v15, %v44
  %v48 = vmul.f32 %v46, %v46
  %v49 = vmul.f32 %v47, %v47
  %v52 = vcombine.high %v48, %v48
  %v53 = vcombine.high %v49, %v49
  %v56 = vsel %vm22, %v48, 0.0
  %v57 = vsel %vm22, %v52, 0.0
  %v58 = vadd.f32 %v56, %v57
  %59 = vadd.xlane.f32.xlu0 %v58
  %v60 = vpop.xlane.xlu0 %59
  %v61 = vsel %vm22, %v49, 0.0
  %v62 = vsel %vm22, %v53, 0.0
  %v63 = vadd.f32 %v61, %v62
  %64 = vadd.xlane.f32.xlu0 %v63
  %v65 = vpop.xlane.xlu0 %64
  %v66 = vsel %vm22, %v60, 0.0
  %v67 = vsel %vm22, %v65, 0.0
  %v68 = vadd.f32 %v66, %v67
  %v69 = vmul.f32 %v68, 0.001953125
  %v70 = vadd.f32 %v69, 1e-05
  %v71 = vrsqrt.pop %v70
  %v72 = vld [vmem:[%s1] sm:$0xf]
  %v73 = vmul.f32 %v72, %v71
  %v74 = vld [vmem:[%s2] sm:$0xf]
  %76 = vset.pattern.permute.xlu0 0
  %77 = vperm.xlu0 %76, %v73
  %v78 = vpop.permute.xlu0 %77
  %v80 = vunpack.c.l.s4 839922192
  %v81 = vunpack.c.0.s8 %v80
  %v82 = vlaneseq
  %v83 = vshrl.u32 %v82, 7
  %v84 = vsub.s32 %v81, %v83
  %v85 = vrot.slane %v78, %v84
  %v87 = vmul.f32 %v46, %v85
  %v88 = vmul.f32 %v47, %v85
  %90 = vset.pattern.permute.xlu0 0
  %91 = vperm.xlu0 %90, %v74
  %v92 = vpop.permute.xlu0 %91
  %v94 = vunpack.c.l.s4 839922192
  %v95 = vunpack.c.0.s8 %v94
  %v96 = vlaneseq
  %v97 = vshrl.u32 %v96, 7
  %v98 = vsub.s32 %v95, %v97
  %v99 = vrot.slane %v92, %v98
  %v101 = vadd.f32 %v87, %v99
  %v102 = vadd.f32 %v88, %v99
  %v103 = vmax.f32 %v101, 0.0
  %v104 = vmax.f32 %v102, 0.0
  %105 = vst [vmem:[%s3] sm:$0xff] %v103
  %106 = vst [vmem:[%s3 + $0x8] sm:$0xff] %v104
  // Predicated region
  $region14: #{bn_relu_act.1} parent=0 // pred_check
    _
  $region15: #{bn_relu_act.1} parent=0 // pred_check_branch
    %108 = sbr.rel (0) target = $region17
  $region16: #{bn_relu_act.1} parent=0 // pred_region
    _
  $region17: #{bn_relu_act.1} parent=0 // pred_fallthru
    _
  // Predicated region
  $region18: #{bn_relu_act.1} parent=0 // pred_check
    _
  $region19: #{bn_relu_act.1} parent=0 // pred_check_branch
    %110 = sbr.rel (0) target = $region21
  $region20: #{bn_relu_act.1} parent=0 // pred_region
    _
  $region21: #{bn_relu_act.1} parent=0 // pred_fallthru
    _

</llo_original>
